<compile_context>
chip_gen: v7x
topology: tpu7x:2x2x1
jax: 0.10.0
libtpu: 0.0.40
codegen_flags: <defaults>
</compile_context>

<pallas_src>
import jax
import jax.numpy as jnp
import numpy as np
from jax.experimental import pallas as pl
from jax.experimental.pallas import tpu as pltpu


def _round_up(x, m):
    return ((x + m - 1) // m) * m


def _cdiv(a, b):
    return -(-a // b)


def _mlp_kernel(x_ref, w1_ref, b1_ref, w2_ref, b2_ref, w3_ref, b3_ref, o_ref):
    """Fused 3-layer MLP on one batch tile.

    x_ref  : [TB, PR1]     activations (f32 or bf16), feature-padded with 0s
    w1_ref : [PR1, PF1]    bf16 weight (already [in, out], zero-padded)
    w2_ref : [PF1, PF2]    bf16
    w3_ref : [PF2, PF3]    bf16
    b*_ref : [1, PF*]      f32 biases (zero-padded)
    o_ref  : [TB, PF3]     f32 lane-dense output (valid cols = [:n_actions])
    """
    x = x_ref[...].astype(jnp.bfloat16)          # no-op if x is already bf16

    # Layer 1: [TB, PR1] @ [PR1, PF1]  (MXU, f32 accumulate)
    h = jnp.dot(x, w1_ref[...], preferred_element_type=jnp.float32)
    h = jnp.maximum(h + b1_ref[...], 0.0)        # f32 bias + ReLU (VPU)

    # Layer 2: [TB, PF1] @ [PF1, PF2]
    h = jnp.dot(h.astype(jnp.bfloat16), w2_ref[...],
                preferred_element_type=jnp.float32)
    h = jnp.maximum(h + b2_ref[...], 0.0)

    # Layer 3: [TB, PF2] @ [PF2, PF3]
    out = jnp.dot(h.astype(jnp.bfloat16), w3_ref[...],
                  preferred_element_type=jnp.float32)
    o_ref[...] = (out + b3_ref[...]).astype(o_ref.dtype)


def pack_params(params):
    """One-time parameter preparation (keep OFF the per-call latency path).

    Takes PyTorch-convention params {w1,b1,w2,b2,w3,b3} with w: [out, in],
    transposes to [in, out], zero-pads each layer independently:
      contraction dim of layer 1 -> multiple of 16 (bf16 sublane),
      every output (lane) dim    -> multiple of 128,
    and casts weights to bf16.
    """
    w1, w2, w3 = params["w1"].T, params["w2"].T, params["w3"].T   # [in, out]
    b1, b2, b3 = params["b1"], params["b2"], params["b3"]
    obs_size, hidden = w1.shape
    hidden2 = w2.shape[1]
    n_actions = w3.shape[1]

    pr1 = _round_up(obs_size, 16)        # layer-1 contraction rows
    pf1 = _round_up(hidden, 128)         # per-layer lane widths
    pf2 = _round_up(hidden2, 128)
    pf3 = _round_up(n_actions, 128)

    def pad_w(w, rows, cols):
        i, o = w.shape
        return (jnp.zeros((rows, cols), jnp.float32)
                .at[:i, :o].set(w).astype(jnp.bfloat16))

    def pad_b(b, cols):
        return jnp.zeros((1, cols), jnp.float32).at[0, : b.shape[0]].set(b)

    return {
        "w1": pad_w(w1, pr1, pf1), "b1": pad_b(b1, pf1),
        "w2": pad_w(w2, pf1, pf2), "b2": pad_b(b2, pf2),
        "w3": pad_w(w3, pf2, pf3), "b3": pad_b(b3, pf3),
        "obs_size": obs_size, "n_actions": n_actions,
        "pr1": pr1, "pf1": pf1, "pf2": pf2, "pf3": pf3,
    }


def net_forward(x, packed, *, block_b=2048, min_split_b=512):
    """x: [B, obs_size] (f32 or bf16).  packed: output of pack_params()."""
    obs_size, n_actions = packed["obs_size"], packed["n_actions"]
    pr1, pf1 = packed["pr1"], packed["pf1"]
    pf2, pf3 = packed["pf2"], packed["pf3"]

    B = x.shape[0]
    assert x.shape[1] == obs_size

    # Feature-pad x up to the sublane-aligned contraction width (no-op when
    # obs_size % 16 == 0).  Padded weight rows are zero, so results are exact.
    if obs_size != pr1:
        x = jnp.pad(x, ((0, 0), (0, pr1 - obs_size)))

    # Batch tiling: single step for small B (per-step overhead dominates);
    # otherwise an EVEN number of near-equal <=block_b-row tiles so v7x's two
    # TensorCores get balanced work ("parallel" axis) and per-step overhead /
    # DMA ramp is amortized over large tiles.
    if B <= min_split_b:
        tb, bp = B, B
    else:
        nsteps = _cdiv(B, block_b)
        nsteps += nsteps % 2                       # even step count for megacore
        tb = _round_up(_cdiv(B, nsteps), 8)
        bp = _round_up(B, tb)
    if bp != B:
        # TODO(synk): for very large ragged B, handle the last partial tile
        # in-kernel instead of this O(B*obs) pad copy.
        x = jnp.pad(x, ((0, bp - B), (0, 0)))

    def build(single_buffer_weights):
        extra = ({"pipeline_mode": pl.Buffered(1)}
                 if single_buffer_weights else {})

        def resident_spec(shape):
            # Constant index_map: fetched once, stays resident across steps.
            return pl.BlockSpec(shape, lambda i: (0, 0), **extra)

        return pl.pallas_call(
            _mlp_kernel,
            out_shape=jax.ShapeDtypeStruct((bp, pf3), jnp.float32),
            grid_spec=pltpu.PrefetchScalarGridSpec(
                num_scalar_prefetch=0,
                grid=(bp // tb,),
                in_specs=[
                    pl.BlockSpec((tb, pr1), lambda i: (i, 0)),   # x tile
                    resident_spec((pr1, pf1)),                    # w1
                    resident_spec((1, pf1)),                      # b1
                    resident_spec((pf1, pf2)),                    # w2
                    resident_spec((1, pf2)),                      # b2
                    resident_spec((pf2, pf3)),                    # w3
                    resident_spec((1, pf3)),                      # b3
                ],
                out_specs=pl.BlockSpec((tb, pf3), lambda i: (i, 0)),
            ),
            compiler_params=pltpu.CompilerParams(
                dimension_semantics=("parallel",),
                vmem_limit_bytes=64 * 1024 * 1024,
            ),
        )

    args = (x, packed["w1"], packed["b1"], packed["w2"], packed["b2"],
            packed["w3"], packed["b3"])

    # Prefer single-buffered resident weights (halves their VMEM footprint);
    # fall back to the default pipelining if this runtime rejects Buffered(1).
    try:
        out_padded = build(True)(*args)
    except Exception:
        out_padded = build(False)(*args)

    # Lane-dense (128-wide) kernel output sliced back to the logical width.
    return out_padded[:B, :n_actions]


def _torch_linear_init(key, out_f, in_f):
    # Deterministic stand-in for nn.Linear's default init:
    # U(-1/sqrt(in_f), 1/sqrt(in_f)) for both weight and bias.
    kw, kb = jax.random.split(key)
    bound = 1.0 / np.sqrt(in_f)
    w = jax.random.uniform(kw, (out_f, in_f), jnp.float32, -bound, bound)
    b = jax.random.uniform(kb, (out_f,), jnp.float32, -bound, bound)
    return w, b


if __name__ == "__main__":
    # Small shapes consistent with the module (env-derived sizes are synthetic).
    batch = 8
    obs_size = 32
    hidden_size = 32
    n_actions = 8

    key = jax.random.PRNGKey(0)
    k_x, k1, k2, k3 = jax.random.split(key, 4)

    w1, b1 = _torch_linear_init(k1, hidden_size, obs_size)
    w2, b2 = _torch_linear_init(k2, hidden_size // 2, hidden_size)
    w3, b3 = _torch_linear_init(k3, n_actions, hidden_size // 2)
    params = {"w1": w1, "b1": b1, "w2": w2, "b2": b2, "w3": w3, "b3": b3}

    # One-time packing (transpose + pad + bf16 cast) -- not on the call path.
    packed = pack_params(params)

    x = jax.random.normal(k_x, (batch, obs_size), jnp.float32)

    out = net_forward(x, packed)
    out = jax.block_until_ready(out)
    assert out.shape == (batch, n_actions)

    # Reference emulating the kernel numerics (bf16 operands, f32 accumulate).
    def q(a):
        return a.astype(jnp.bfloat16).astype(jnp.float32)

    h1 = jnp.maximum(q(x) @ q(w1.T) + b1, 0.0)
    h2 = jnp.maximum(q(h1) @ q(w2.T) + b2, 0.0)
    ref = q(h2) @ q(w3.T) + b3
    np.testing.assert_allclose(np.asarray(out), np.asarray(ref),
                               rtol=1e-4, atol=1e-4)

    # Sanity vs pure-f32 PyTorch semantics (looser tol for bf16 MXU operands).
    h1f = jnp.maximum(x @ w1.T + b1, 0.0)
    h2f = jnp.maximum(h1f @ w2.T + b2, 0.0)
    reff = h2f @ w3.T + b3
    np.testing.assert_allclose(np.asarray(out), np.asarray(reff),
                               rtol=5e-2, atol=5e-2)

    print("KERNEL_OK")
</pallas_src>

<mosaic_0001>
module attributes {stable_mosaic.version = 11 : i64} {
  func.func @_mlp_kernel(%arg0: i32, %arg1: memref<8x32xf32, #tpu.memory_space<vmem>>, %arg2: memref<32x128xbf16, #tpu.memory_space<vmem>>, %arg3: memref<1x128xf32, #tpu.memory_space<vmem>>, %arg4: memref<128x128xbf16, #tpu.memory_space<vmem>>, %arg5: memref<1x128xf32, #tpu.memory_space<vmem>>, %arg6: memref<128x128xbf16, #tpu.memory_space<vmem>>, %arg7: memref<1x128xf32, #tpu.memory_space<vmem>>, %arg8: memref<8x128xf32, #tpu.memory_space<vmem>>) attributes {dimension_semantics = [#tpu.dimension_semantics<parallel>], iteration_bounds = array<i64: 1>, scalar_prefetch = 0 : i64, scratch_operands = 0 : i64, tpu.core_type = #tpu.core_type<tc>, window_params = [{transform_indices = @transform_0, window_bounds = array<i64: 8, 32>}, {pipeline_mode = #tpu.pipeline_mode<synchronous>, transform_indices = @transform_1, window_bounds = array<i64: 32, 128>}, {pipeline_mode = #tpu.pipeline_mode<synchronous>, transform_indices = @transform_2, window_bounds = array<i64: 1, 128>}, {pipeline_mode = #tpu.pipeline_mode<synchronous>, transform_indices = @transform_3, window_bounds = array<i64: 128, 128>}, {pipeline_mode = #tpu.pipeline_mode<synchronous>, transform_indices = @transform_4, window_bounds = array<i64: 1, 128>}, {pipeline_mode = #tpu.pipeline_mode<synchronous>, transform_indices = @transform_5, window_bounds = array<i64: 128, 128>}, {pipeline_mode = #tpu.pipeline_mode<synchronous>, transform_indices = @transform_6, window_bounds = array<i64: 1, 128>}, {transform_indices = @transform_7, window_bounds = array<i64: 8, 128>}]} {
    %c0 = arith.constant 0 : index
    %c0_0 = arith.constant 0 : index
    %0 = vector.load %arg1[%c0, %c0_0] : memref<8x32xf32, #tpu.memory_space<vmem>>, vector<8x32xf32>
    %1 = arith.truncf %0 : vector<8x32xf32> to vector<8x32xbf16>
    %c0_1 = arith.constant 0 : index
    %c0_2 = arith.constant 0 : index
    %2 = vector.load %arg2[%c0_1, %c0_2] : memref<32x128xbf16, #tpu.memory_space<vmem>>, vector<32x128xbf16>
    %cst = arith.constant dense<0.000000e+00> : vector<8x128xf32>
    %3 = tpu.matmul %1, %2, %cst {dimension_numbers = #tpu.dot_dimension_numbers<[1], [0], [0], [1], [0, 0, 1, 1], [], []>} : vector<8x32xbf16>, vector<32x128xbf16>, vector<8x128xf32> -> vector<8x128xf32>
    %c0_3 = arith.constant 0 : index
    %c0_4 = arith.constant 0 : index
    %4 = vector.load %arg3[%c0_3, %c0_4] : memref<1x128xf32, #tpu.memory_space<vmem>>, vector<1x128xf32>
    %5 = vector.broadcast %4 : vector<1x128xf32> to vector<8x128xf32>
    %6 = arith.addf %3, %5 : vector<8x128xf32>
    %cst_5 = arith.constant 0.000000e+00 : f32
    %7 = vector.broadcast %cst_5 : f32 to vector<8x128xf32>
    %8 = arith.maximumf %6, %7 : vector<8x128xf32>
    %9 = arith.truncf %8 : vector<8x128xf32> to vector<8x128xbf16>
    %c0_6 = arith.constant 0 : index
    %c0_7 = arith.constant 0 : index
    %10 = vector.load %arg4[%c0_6, %c0_7] : memref<128x128xbf16, #tpu.memory_space<vmem>>, vector<128x128xbf16>
    %cst_8 = arith.constant dense<0.000000e+00> : vector<8x128xf32>
    %11 = tpu.matmul %9, %10, %cst_8 {dimension_numbers = #tpu.dot_dimension_numbers<[1], [0], [0], [1], [0, 0, 1, 1], [], []>} : vector<8x128xbf16>, vector<128x128xbf16>, vector<8x128xf32> -> vector<8x128xf32>
    %c0_9 = arith.constant 0 : index
    %c0_10 = arith.constant 0 : index
    %12 = vector.load %arg5[%c0_9, %c0_10] : memref<1x128xf32, #tpu.memory_space<vmem>>, vector<1x128xf32>
    %13 = vector.broadcast %12 : vector<1x128xf32> to vector<8x128xf32>
    %14 = arith.addf %11, %13 : vector<8x128xf32>
    %cst_11 = arith.constant 0.000000e+00 : f32
    %15 = vector.broadcast %cst_11 : f32 to vector<8x128xf32>
    %16 = arith.maximumf %14, %15 : vector<8x128xf32>
    %17 = arith.truncf %16 : vector<8x128xf32> to vector<8x128xbf16>
    %c0_12 = arith.constant 0 : index
    %c0_13 = arith.constant 0 : index
    %18 = vector.load %arg6[%c0_12, %c0_13] : memref<128x128xbf16, #tpu.memory_space<vmem>>, vector<128x128xbf16>
    %cst_14 = arith.constant dense<0.000000e+00> : vector<8x128xf32>
    %19 = tpu.matmul %17, %18, %cst_14 {dimension_numbers = #tpu.dot_dimension_numbers<[1], [0], [0], [1], [0, 0, 1, 1], [], []>} : vector<8x128xbf16>, vector<128x128xbf16>, vector<8x128xf32> -> vector<8x128xf32>
    %c0_15 = arith.constant 0 : index
    %c0_16 = arith.constant 0 : index
    %20 = vector.load %arg7[%c0_15, %c0_16] : memref<1x128xf32, #tpu.memory_space<vmem>>, vector<1x128xf32>
    %21 = vector.broadcast %20 : vector<1x128xf32> to vector<8x128xf32>
    %22 = arith.addf %19, %21 : vector<8x128xf32>
    %c0_17 = arith.constant 0 : index
    %c0_18 = arith.constant 0 : index
    %23 = vector.load %arg8[%c0_17, %c0_18] : memref<8x128xf32, #tpu.memory_space<vmem>>, vector<8x128xf32>
    tpu.vector_store %arg8[%c0_17, %c0_18], %22 {strides = array<i32>} : memref<8x128xf32, #tpu.memory_space<vmem>>, vector<8x128xf32>,
    return
  }
  func.func @transform_0(%arg0: i32) -> (i32, i32) {
    %c0_i32 = arith.constant 0 : i32
    %c0_i32_0 = arith.constant 0 : i32
    return %arg0, %c0_i32 : i32, i32
  }
  func.func @transform_1(%arg0: i32) -> (i32, i32) {
    %c0_i32 = arith.constant 0 : i32
    %c0_i32_0 = arith.constant 0 : i32
    %c0_i32_1 = arith.constant 0 : i32
    return %c0_i32, %c0_i32_0 : i32, i32
  }
  func.func @transform_2(%arg0: i32) -> (i32, i32) {
    %c0_i32 = arith.constant 0 : i32
    %c0_i32_0 = arith.constant 0 : i32
    %c0_i32_1 = arith.constant 0 : i32
    return %c0_i32, %c0_i32_0 : i32, i32
  }
  func.func @transform_3(%arg0: i32) -> (i32, i32) {
    %c0_i32 = arith.constant 0 : i32
    %c0_i32_0 = arith.constant 0 : i32
    %c0_i32_1 = arith.constant 0 : i32
    return %c0_i32, %c0_i32_0 : i32, i32
  }
  func.func @transform_4(%arg0: i32) -> (i32, i32) {
    %c0_i32 = arith.constant 0 : i32
    %c0_i32_0 = arith.constant 0 : i32
    %c0_i32_1 = arith.constant 0 : i32
    return %c0_i32, %c0_i32_0 : i32, i32
  }
  func.func @transform_5(%arg0: i32) -> (i32, i32) {
    %c0_i32 = arith.constant 0 : i32
    %c0_i32_0 = arith.constant 0 : i32
    %c0_i32_1 = arith.constant 0 : i32
    return %c0_i32, %c0_i32_0 : i32, i32
  }
  func.func @transform_6(%arg0: i32) -> (i32, i32) {
    %c0_i32 = arith.constant 0 : i32
    %c0_i32_0 = arith.constant 0 : i32
    %c0_i32_1 = arith.constant 0 : i32
    return %c0_i32, %c0_i32_0 : i32, i32
  }
  func.func @transform_7(%arg0: i32) -> (i32, i32) {
    %c0_i32 = arith.constant 0 : i32
    %c0_i32_0 = arith.constant 0 : i32
    return %arg0, %c0_i32 : i32, i32
  }
}

module attributes {stable_mosaic.version = 11 : i64} {
  func.func @_mlp_kernel(%arg0: i32, %arg1: memref<8x32xf32, #tpu.memory_space<vmem>>, %arg2: memref<32x128xbf16, #tpu.memory_space<vmem>>, %arg3: memref<1x128xf32, #tpu.memory_space<vmem>>, %arg4: memref<128x128xbf16, #tpu.memory_space<vmem>>, %arg5: memref<1x128xf32, #tpu.memory_space<vmem>>, %arg6: memref<128x128xbf16, #tpu.memory_space<vmem>>, %arg7: memref<1x128xf32, #tpu.memory_space<vmem>>, %arg8: memref<8x128xf32, #tpu.memory_space<vmem>>) attributes {dimension_semantics = [#tpu.dimension_semantics<parallel>], iteration_bounds = array<i64: 1>, scalar_prefetch = 0 : i64, scratch_operands = 0 : i64, tpu.core_type = #tpu.core_type<tc>, window_params = [{transform_indices = @transform_0, window_bounds = array<i64: 8, 32>}, {pipeline_mode = #tpu.pipeline_mode<synchronous>, transform_indices = @transform_1, window_bounds = array<i64: 32, 128>}, {pipeline_mode = #tpu.pipeline_mode<synchronous>, transform_indices = @transform_2, window_bounds = array<i64: 1, 128>}, {pipeline_mode = #tpu.pipeline_mode<synchronous>, transform_indices = @transform_3, window_bounds = array<i64: 128, 128>}, {pipeline_mode = #tpu.pipeline_mode<synchronous>, transform_indices = @transform_4, window_bounds = array<i64: 1, 128>}, {pipeline_mode = #tpu.pipeline_mode<synchronous>, transform_indices = @transform_5, window_bounds = array<i64: 128, 128>}, {pipeline_mode = #tpu.pipeline_mode<synchronous>, transform_indices = @transform_6, window_bounds = array<i64: 1, 128>}, {transform_indices = @transform_7, window_bounds = array<i64: 8, 128>}]} {
    %c0 = arith.constant 0 : index
    %c0_0 = arith.constant 0 : index
    %0 = vector.load %arg1[%c0, %c0_0] : memref<8x32xf32, #tpu.memory_space<vmem>>, vector<8x32xf32>
    %1 = arith.truncf %0 : vector<8x32xf32> to vector<8x32xbf16>
    %c0_1 = arith.constant 0 : index
    %c0_2 = arith.constant 0 : index
    %2 = vector.load %arg2[%c0_1, %c0_2] : memref<32x128xbf16, #tpu.memory_space<vmem>>, vector<32x128xbf16>
    %cst = arith.constant dense<0.000000e+00> : vector<8x128xf32>
    %3 = tpu.matmul %1, %2, %cst {dimension_numbers = #tpu.dot_dimension_numbers<[1], [0], [0], [1], [0, 0, 1, 1], [], []>} : vector<8x32xbf16>, vector<32x128xbf16>, vector<8x128xf32> -> vector<8x128xf32>
    %c0_3 = arith.constant 0 : index
    %c0_4 = arith.constant 0 : index
    %4 = vector.load %arg3[%c0_3, %c0_4] : memref<1x128xf32, #tpu.memory_space<vmem>>, vector<1x128xf32>
    %5 = vector.broadcast %4 : vector<1x128xf32> to vector<8x128xf32>
    %6 = arith.addf %3, %5 : vector<8x128xf32>
    %cst_5 = arith.constant 0.000000e+00 : f32
    %7 = vector.broadcast %cst_5 : f32 to vector<8x128xf32>
    %8 = arith.maximumf %6, %7 : vector<8x128xf32>
    %9 = arith.truncf %8 : vector<8x128xf32> to vector<8x128xbf16>
    %c0_6 = arith.constant 0 : index
    %c0_7 = arith.constant 0 : index
    %10 = vector.load %arg4[%c0_6, %c0_7] : memref<128x128xbf16, #tpu.memory_space<vmem>>, vector<128x128xbf16>
    %cst_8 = arith.constant dense<0.000000e+00> : vector<8x128xf32>
    %11 = tpu.matmul %9, %10, %cst_8 {dimension_numbers = #tpu.dot_dimension_numbers<[1], [0], [0], [1], [0, 0, 1, 1], [], []>} : vector<8x128xbf16>, vector<128x128xbf16>, vector<8x128xf32> -> vector<8x128xf32>
    %c0_9 = arith.constant 0 : index
    %c0_10 = arith.constant 0 : index
    %12 = vector.load %arg5[%c0_9, %c0_10] : memref<1x128xf32, #tpu.memory_space<vmem>>, vector<1x128xf32>
    %13 = vector.broadcast %12 : vector<1x128xf32> to vector<8x128xf32>
    %14 = arith.addf %11, %13 : vector<8x128xf32>
    %cst_11 = arith.constant 0.000000e+00 : f32
    %15 = vector.broadcast %cst_11 : f32 to vector<8x128xf32>
    %16 = arith.maximumf %14, %15 : vector<8x128xf32>
    %17 = arith.truncf %16 : vector<8x128xf32> to vector<8x128xbf16>
    %c0_12 = arith.constant 0 : index
    %c0_13 = arith.constant 0 : index
    %18 = vector.load %arg6[%c0_12, %c0_13] : memref<128x128xbf16, #tpu.memory_space<vmem>>, vector<128x128xbf16>
    %cst_14 = arith.constant dense<0.000000e+00> : vector<8x128xf32>
    %19 = tpu.matmul %17, %18, %cst_14 {dimension_numbers = #tpu.dot_dimension_numbers<[1], [0], [0], [1], [0, 0, 1, 1], [], []>} : vector<8x128xbf16>, vector<128x128xbf16>, vector<8x128xf32> -> vector<8x128xf32>
    %c0_15 = arith.constant 0 : index
    %c0_16 = arith.constant 0 : index
    %20 = vector.load %arg7[%c0_15, %c0_16] : memref<1x128xf32, #tpu.memory_space<vmem>>, vector<1x128xf32>
    %21 = vector.broadcast %20 : vector<1x128xf32> to vector<8x128xf32>
    %22 = arith.addf %19, %21 : vector<8x128xf32>
    %c0_17 = arith.constant 0 : index
    %c0_18 = arith.constant 0 : index
    %23 = vector.load %arg8[%c0_17, %c0_18] : memref<8x128xf32, #tpu.memory_space<vmem>>, vector<8x128xf32>
    tpu.vector_store %arg8[%c0_17, %c0_18], %22 {strides = array<i32>} : memref<8x128xf32, #tpu.memory_space<vmem>>, vector<8x128xf32>,
    return
  }
  func.func @transform_0(%arg0: i32) -> (i32, i32) {
    %c0_i32 = arith.constant 0 : i32
    %c0_i32_0 = arith.constant 0 : i32
    return %arg0, %c0_i32 : i32, i32
  }
  func.func @transform_1(%arg0: i32) -> (i32, i32) {
    %c0_i32 = arith.constant 0 : i32
    %c0_i32_0 = arith.constant 0 : i32
    %c0_i32_1 = arith.constant 0 : i32
    return %c0_i32, %c0_i32_0 : i32, i32
  }
  func.func @transform_2(%arg0: i32) -> (i32, i32) {
    %c0_i32 = arith.constant 0 : i32
    %c0_i32_0 = arith.constant 0 : i32
    %c0_i32_1 = arith.constant 0 : i32
    return %c0_i32, %c0_i32_0 : i32, i32
  }
  func.func @transform_3(%arg0: i32) -> (i32, i32) {
    %c0_i32 = arith.constant 0 : i32
    %c0_i32_0 = arith.constant 0 : i32
    %c0_i32_1 = arith.constant 0 : i32
    return %c0_i32, %c0_i32_0 : i32, i32
  }
  func.func @transform_4(%arg0: i32) -> (i32, i32) {
    %c0_i32 = arith.constant 0 : i32
    %c0_i32_0 = arith.constant 0 : i32
    %c0_i32_1 = arith.constant 0 : i32
    return %c0_i32, %c0_i32_0 : i32, i32
  }
  func.func @transform_5(%arg0: i32) -> (i32, i32) {
    %c0_i32 = arith.constant 0 : i32
    %c0_i32_0 = arith.constant 0 : i32
    %c0_i32_1 = arith.constant 0 : i32
    return %c0_i32, %c0_i32_0 : i32, i32
  }
  func.func @transform_6(%arg0: i32) -> (i32, i32) {
    %c0_i32 = arith.constant 0 : i32
    %c0_i32_0 = arith.constant 0 : i32
    %c0_i32_1 = arith.constant 0 : i32
    return %c0_i32, %c0_i32_0 : i32, i32
  }
  func.func @transform_7(%arg0: i32) -> (i32, i32) {
    %c0_i32 = arith.constant 0 : i32
    %c0_i32_0 = arith.constant 0 : i32
    return %arg0, %c0_i32 : i32, i32
  }
}

</mosaic_0001>

<llo_original>
// kernel: tpu_custom_call.1
$region0: #{tpu_custom_call.1}
  #allocation0 [shape = 'u32[]', space=smem, size = 0x4, offset = 0x4, fixed_abs, tag = 'smem constant byte address 0x4 - core index']
  #allocation1 [shape = 'u32[144,128]{1,0:T(1,128)}', space=vmem, size = 0x12000, scoped, tag = 'internal scratch']
  %s0 = inlined_call_operand.hbm [shape: f32[8,32], index: 0, kind: input, shape index: {}]
  %s1 = inlined_call_operand.hbm [shape: bf16[32,128], index: 1, kind: input, shape index: {}]
  %s2 = inlined_call_operand.hbm [shape: f32[1,128], index: 2, kind: input, shape index: {}]
  %s3 = inlined_call_operand.hbm [shape: bf16[128,128], index: 3, kind: input, shape index: {}]
  %s4 = inlined_call_operand.hbm [shape: f32[1,128], index: 4, kind: input, shape index: {}]
  %s5 = inlined_call_operand.hbm [shape: bf16[128,128], index: 5, kind: input, shape index: {}]
  %s6 = inlined_call_operand.hbm [shape: f32[1,128], index: 6, kind: input, shape index: {}]
  %s7 = inlined_call_operand.hbm [shape: f32[8,128], index: 7, kind: output, shape index: {}]
  %s8 = sld [smem:[#allocation0]]
  $region66: #{tpu_custom_call.1} parent=0
    _
  %s10 = ssub.s32 1, %s8
  %s11 = scalar_select 0, %s10, %s8
  $region1: #{tpu_custom_call.1} parent=0
    #allocation2 [shape = 'u8[4096]{0}', space=vmem, size = 0x1000, scoped, tag = 'input window, operand 0, single buffered']
    #allocation3 [shape = 's32[1]{0}', space=sflag, size = 0x4, scoped, tag = 'scoped memory for tpu_custom_call.1']
    #allocation4 [shape = 's32[1]{0}', space=sflag, size = 0x4, scoped, tag = 'scoped memory for tpu_custom_call.1']
    #allocation5 [shape = 'u8[8192]{0}', space=vmem, size = 0x2000, scoped, tag = 'input window, operand 1, single buffered']
    #allocation6 [shape = 's32[1]{0}', space=sflag, size = 0x4, scoped, tag = 'scoped memory for tpu_custom_call.1']
    #allocation7 [shape = 'u8[512]{0}', space=vmem, size = 0x400, scoped, tag = 'input window, operand 2, single buffered']
    #allocation8 [shape = 'u8[32768]{0}', space=vmem, size = 0x8000, scoped, tag = 'input window, operand 3, single buffered']
    #allocation9 [shape = 's32[1]{0}', space=sflag, size = 0x4, scoped, tag = 'scoped memory for tpu_custom_call.1']
    #allocation10 [shape = 'u8[512]{0}', space=vmem, size = 0x400, scoped, tag = 'input window, operand 4, single buffered']
    #allocation11 [shape = 'u8[32768]{0}', space=vmem, size = 0x8000, scoped, tag = 'input window, operand 5, single buffered']
    #allocation12 [shape = 's32[1]{0}', space=sflag, size = 0x4, scoped, tag = 'scoped memory for tpu_custom_call.1']
    #allocation13 [shape = 'u8[512]{0}', space=vmem, size = 0x400, scoped, tag = 'input window, operand 6, single buffered']
    #allocation14 [shape = 'u8[4096]{0}', space=vmem, size = 0x1000, scoped, tag = 'output window, operand 0, single buffered']
    %12 = vsyncpa [#allocation3], 0
    %13 = vsyncpa [#allocation6], 0
    %14 = vsyncpa [#allocation9], 0
    %15 = vsyncpa [#allocation12], 0
    %16 = vsyncpa [#allocation4], 0
    // Predicated region
    $region2: #{tpu_custom_call.1} parent=1 // pred_check
      _
    $region3: #{tpu_custom_call.1} parent=1 // pred_check_branch
      %18 = sbr.rel (0) target = $region5
    $region4: #{tpu_custom_call.1} parent=1 // pred_region
      %s20 = ssub.s32 128, 128
      %21 = vsyncadd [#allocation3], %s20
      %s23 = sshll.u32 [#allocation2], 4
      %s24 = int_to_ptr.vmem [resolvable:$true] %s23
      %26 = dma.hbm_to_vmem [thread:$0]  %s0, 128, %s24, [#allocation3]
    $region5: #{tpu_custom_call.1} parent=1 // pred_fallthru
      _
    // Predicated region
    $region6: #{tpu_custom_call.1} parent=1 // pred_check
      _
    $region7: #{tpu_custom_call.1} parent=1 // pred_check_branch
      %28 = sbr.rel (0) target = $region9
    $region8: #{tpu_custom_call.1} parent=1 // pred_region
      %s30 = ssub.s32 256, 256
      %31 = vsyncadd [#allocation6], %s30
      %s32 = sshll.u32 [#allocation5], 4
      %s33 = int_to_ptr.vmem [resolvable:$true] %s32
      %38 = dma.hbm_to_vmem [thread:$0]  %s1, 256, %s33, [#allocation6], 64, 64, 4
    $region9: #{tpu_custom_call.1} parent=1 // pred_fallthru
      _
    // Predicated region
    $region10: #{tpu_custom_call.1} parent=1 // pred_check
      _
    $region11: #{tpu_custom_call.1} parent=1 // pred_check_branch
      %40 = sbr.rel (0) target = $region13
    $region12: #{tpu_custom_call.1} parent=1 // pred_region
      %s42 = ssub.s32 16, 16
      %43 = vsyncadd [#allocation6], %s42
      %s45 = sshll.u32 [#allocation7], 4
      %s46 = int_to_ptr.vmem [resolvable:$true] %s45
      %48 = dma.hbm_to_vmem [thread:$0]  %s2, 16, %s46, [#allocation6]
    $region13: #{tpu_custom_call.1} parent=1 // pred_fallthru
      _
    // Predicated region
    $region14: #{tpu_custom_call.1} parent=1 // pred_check
      _
    $region15: #{tpu_custom_call.1} parent=1 // pred_check_branch
      %50 = sbr.rel (0) target = $region17
    $region16: #{tpu_custom_call.1} parent=1 // pred_region
      %s52 = ssub.s32 1024, 1024
      %53 = vsyncadd [#allocation9], %s52
      %s54 = sshll.u32 [#allocation8], 4
      %s55 = int_to_ptr.vmem [resolvable:$true] %s54
      %60 = dma.hbm_to_vmem [thread:$0]  %s3, 1024, %s55, [#allocation9], 64, 64, 4
    $region17: #{tpu_custom_call.1} parent=1 // pred_fallthru
      _
    // Predicated region
    $region18: #{tpu_custom_call.1} parent=1 // pred_check
      _
    $region19: #{tpu_custom_call.1} parent=1 // pred_check_branch
      %62 = sbr.rel (0) target = $region21
    $region20: #{tpu_custom_call.1} parent=1 // pred_region
      %s64 = ssub.s32 16, 16
      %65 = vsyncadd [#allocation9], %s64
      %s67 = sshll.u32 [#allocation10], 4
      %s68 = int_to_ptr.vmem [resolvable:$true] %s67
      %70 = dma.hbm_to_vmem [thread:$0]  %s4, 16, %s68, [#allocation9]
    $region21: #{tpu_custom_call.1} parent=1 // pred_fallthru
      _
    // Predicated region
    $region22: #{tpu_custom_call.1} parent=1 // pred_check
      _
    $region23: #{tpu_custom_call.1} parent=1 // pred_check_branch
      %72 = sbr.rel (0) target = $region25
    $region24: #{tpu_custom_call.1} parent=1 // pred_region
      %s74 = ssub.s32 1024, 1024
      %75 = vsyncadd [#allocation12], %s74
      %s76 = sshll.u32 [#allocation11], 4
      %s77 = int_to_ptr.vmem [resolvable:$true] %s76
      %82 = dma.hbm_to_vmem [thread:$0]  %s5, 1024, %s77, [#allocation12], 64, 64, 4
    $region25: #{tpu_custom_call.1} parent=1 // pred_fallthru
      _
    // Predicated region
    $region26: #{tpu_custom_call.1} parent=1 // pred_check
      _
    $region27: #{tpu_custom_call.1} parent=1 // pred_check_branch
      %84 = sbr.rel (0) target = $region29
    $region28: #{tpu_custom_call.1} parent=1 // pred_region
      %s86 = ssub.s32 16, 16
      %87 = vsyncadd [#allocation12], %s86
      %s89 = sshll.u32 [#allocation13], 4
      %s90 = int_to_ptr.vmem [resolvable:$true] %s89
      %92 = dma.hbm_to_vmem [thread:$0]  %s6, 16, %s90, [#allocation12]
    $region29: #{tpu_custom_call.1} parent=1 // pred_fallthru
      _
    // Predicated region
    $region30: #{tpu_custom_call.1} parent=1 // pred_check
      _
    $region31: #{tpu_custom_call.1} parent=1 // pred_check_branch
      %94 = sbr.rel (0) target = $region33
    $region32: #{tpu_custom_call.1} parent=1 // pred_region
      %95 = dma.done [#allocation3], 128
    $region33: #{tpu_custom_call.1} parent=1 // pred_fallthru
      _
    // Predicated region
    $region34: #{tpu_custom_call.1} parent=1 // pred_check
      _
    $region35: #{tpu_custom_call.1} parent=1 // pred_check_branch
      %97 = sbr.rel (0) target = $region37
    $region36: #{tpu_custom_call.1} parent=1 // pred_region
      %98 = dma.done [#allocation6], 256
    $region37: #{tpu_custom_call.1} parent=1 // pred_fallthru
      _
    // Predicated region
    $region38: #{tpu_custom_call.1} parent=1 // pred_check
      _
    $region39: #{tpu_custom_call.1} parent=1 // pred_check_branch
      %100 = sbr.rel (0) target = $region41
    $region40: #{tpu_custom_call.1} parent=1 // pred_region
      %101 = dma.done [#allocation6], 16
    $region41: #{tpu_custom_call.1} parent=1 // pred_fallthru
      _
    // Predicated region
    $region42: #{tpu_custom_call.1} parent=1 // pred_check
      _
    $region43: #{tpu_custom_call.1} parent=1 // pred_check_branch
      %103 = sbr.rel (0) target = $region45
    $region44: #{tpu_custom_call.1} parent=1 // pred_region
      %104 = dma.done [#allocation9], 1024
    $region45: #{tpu_custom_call.1} parent=1 // pred_fallthru
      _
    // Predicated region
    $region46: #{tpu_custom_call.1} parent=1 // pred_check
      _
    $region47: #{tpu_custom_call.1} parent=1 // pred_check_branch
      %106 = sbr.rel (0) target = $region49
    $region48: #{tpu_custom_call.1} parent=1 // pred_region
      %107 = dma.done [#allocation9], 16
    $region49: #{tpu_custom_call.1} parent=1 // pred_fallthru
      _
    // Predicated region
    $region50: #{tpu_custom_call.1} parent=1 // pred_check
      _
    $region51: #{tpu_custom_call.1} parent=1 // pred_check_branch
      %109 = sbr.rel (0) target = $region53
    $region52: #{tpu_custom_call.1} parent=1 // pred_region
      %110 = dma.done [#allocation12], 1024
    $region53: #{tpu_custom_call.1} parent=1 // pred_fallthru
      _
    // Predicated region
    $region54: #{tpu_custom_call.1} parent=1 // pred_check
      _
    $region55: #{tpu_custom_call.1} parent=1 // pred_check_branch
      %112 = sbr.rel (0) target = $region57
    $region56: #{tpu_custom_call.1} parent=1 // pred_region
      %113 = dma.done [#allocation12], 16
    $region57: #{tpu_custom_call.1} parent=1 // pred_fallthru
      _
    %v115 = vld [vmem:[#allocation2] sm:$0xff]
    %v116 = vpack.c.bf16 %v115, %v115
    %v117 = vld [vmem:[#allocation5] sm:$0xf]
    %v118 = vld [vmem:[#allocation5 + $0x4] sm:$0xf]
    %v119 = vld [vmem:[#allocation5 + $0x8] sm:$0xf]
    %v120 = vld [vmem:[#allocation5 + $0xc] sm:$0xf]
    %v121 = vld [vmem:[#allocation7] sm:$0x1]
    %v123 = vlaneseq
    %v124 = vshrl.u32 %v123, 7
    %v125 = vsub.s32 0, %v124
    %v126 = vrot.slane %v121, %v125
    %v132 = vunpack.c.l.b16 %v117
    %v133 = vunpack.c.l.b16 %v118
    %v134 = vunpack.c.l.b16 %v119
    %v135 = vunpack.c.l.b16 %v120
    %v136 = vpack.c.b16 %v133, %v132
    %v137 = vpack.c.b16 %v135, %v134
    %vm140 = vcmask 261120
    %v142 = vsel %vm140, %v116, 0
    %144 = vmatprep.subr.bf16.mxu0 0
    %145 = vmatpush1.bf16.msra.mxu0 %v136
    %146 = vmatprep.subr.bf16.mxu0 0
    %147 = vmatpush1.bf16.msra.mxu0 %v137
    %148 = vmatprep.subr.bf16.mxu0 0
    %149 = vmatpush1.bf16.msra.mxu0 0
    %150 = vmatprep.subr.bf16.mxu0 0
    %151 = vmatpush1.bf16.msra.mxu0 0
    %152 = vmatprep.subr.bf16.mxu0 0
    %153 = vmatpush1.bf16.msra.mxu0 0
    %154 = vmatprep.subr.bf16.mxu0 0
    %155 = vmatpush1.bf16.msra.mxu0 0
    %156 = vmatprep.subr.bf16.mxu0 0
    %157 = vmatpush1.bf16.msra.mxu0 0
    %158 = vmatprep.subr.bf16.mxu0 0
    %159 = vmatpush1.bf16.msra.mxu0 0
    %160 = vmatprep.subr.bf16.mxu0 0
    %161 = vmatpush1.bf16.msra.mxu0 0
    %162 = vmatprep.subr.bf16.mxu0 0
    %163 = vmatpush1.bf16.msra.mxu0 0
    %164 = vmatprep.subr.bf16.mxu0 0
    %165 = vmatpush1.bf16.msra.mxu0 0
    %166 = vmatprep.subr.bf16.mxu0 0
    %167 = vmatpush1.bf16.msra.mxu0 0
    %168 = vmatprep.subr.bf16.mxu0 0
    %169 = vmatpush1.bf16.msra.mxu0 0
    %170 = vmatprep.subr.bf16.mxu0 0
    %171 = vmatpush1.bf16.msra.mxu0 0
    %172 = vmatprep.subr.bf16.mxu0 0
    %173 = vmatpush1.bf16.msra.mxu0 0
    %174 = vmatprep.subr.bf16.mxu0 0
    %175 = vmatpush1.bf16.msra.mxu0 0
    %176 = vmatprep.mubr.bf16.mxu0 0
    %177 = vmatmul.mubr.bf16.gmra.mrb[0].mxu0 %v142
    %v178 = vpop.f32.mrb[0].mxu0
    %v179 = vadd.f32 %v126, %v178
    %v180 = vpop.f32.mrb[0].mxu0
    %v181 = vpop.f32.mrb[0].mxu0
    %v182 = vpop.f32.mrb[0].mxu0
    %183 = vdwg.mxu0
    %v184 = vmax.f32 %v179, 0.0
    %v185 = vpack.c.bf16 %v184, %v184
    %v186 = vld [vmem:[#allocation8] sm:$0xf]
    %v187 = vld [vmem:[#allocation8 + $0x4] sm:$0xf]
    %v188 = vld [vmem:[#allocation8 + $0x8] sm:$0xf]
    %v189 = vld [vmem:[#allocation8 + $0xc] sm:$0xf]
    %v190 = vld [vmem:[#allocation8 + $0x10] sm:$0xf]
    %v191 = vld [vmem:[#allocation8 + $0x14] sm:$0xf]
    %v192 = vld [vmem:[#allocation8 + $0x18] sm:$0xf]
    %v193 = vld [vmem:[#allocation8 + $0x1c] sm:$0xf]
    %v194 = vld [vmem:[#allocation8 + $0x20] sm:$0xf]
    %v195 = vld [vmem:[#allocation8 + $0x24] sm:$0xf]
    %v196 = vld [vmem:[#allocation8 + $0x28] sm:$0xf]
    %v197 = vld [vmem:[#allocation8 + $0x2c] sm:$0xf]
    %v198 = vld [vmem:[#allocation8 + $0x30] sm:$0xf]
    %v199 = vld [vmem:[#allocation8 + $0x34] sm:$0xf]
    %v200 = vld [vmem:[#allocation8 + $0x38] sm:$0xf]
    %v201 = vld [vmem:[#allocation8 + $0x3c] sm:$0xf]
    %v202 = vld [vmem:[#allocation10] sm:$0x1]
    %v204 = vlaneseq
    %v205 = vshrl.u32 %v204, 7
    %v206 = vsub.s32 0, %v205
    %v207 = vrot.slane %v202, %v206
    %v225 = vunpack.c.l.b16 %v186
    %v226 = vunpack.c.l.b16 %v187
    %v227 = vunpack.c.l.b16 %v188
    %v228 = vunpack.c.l.b16 %v189
    %v229 = vunpack.c.l.b16 %v190
    %v230 = vunpack.c.l.b16 %v191
    %v231 = vunpack.c.l.b16 %v192
    %v232 = vunpack.c.l.b16 %v193
    %v233 = vunpack.c.l.b16 %v194
    %v234 = vunpack.c.l.b16 %v195
    %v235 = vunpack.c.l.b16 %v196
    %v236 = vunpack.c.l.b16 %v197
    %v237 = vunpack.c.l.b16 %v198
    %v238 = vunpack.c.l.b16 %v199
    %v239 = vunpack.c.l.b16 %v200
    %v240 = vunpack.c.l.b16 %v201
    %v241 = vpack.c.b16 %v226, %v225
    %v242 = vpack.c.b16 %v228, %v227
    %v243 = vpack.c.b16 %v230, %v229
    %v244 = vpack.c.b16 %v232, %v231
    %v245 = vpack.c.b16 %v234, %v233
    %v246 = vpack.c.b16 %v236, %v235
    %v247 = vpack.c.b16 %v238, %v237
    %v248 = vpack.c.b16 %v240, %v239
    %257 = vmatprep.subr.bf16.mxu0 0
    %258 = vmatpush1.bf16.msra.mxu0 %v241
    %259 = vmatprep.subr.bf16.mxu0 0
    %260 = vmatpush1.bf16.msra.mxu0 %v242
    %261 = vmatprep.subr.bf16.mxu0 0
    %262 = vmatpush1.bf16.msra.mxu0 %v243
    %263 = vmatprep.subr.bf16.mxu0 0
    %264 = vmatpush1.bf16.msra.mxu0 %v244
    %265 = vmatprep.subr.bf16.mxu0 0
    %266 = vmatpush1.bf16.msra.mxu0 %v245
    %267 = vmatprep.subr.bf16.mxu0 0
    %268 = vmatpush1.bf16.msra.mxu0 %v246
    %269 = vmatprep.subr.bf16.mxu0 0
    %270 = vmatpush1.bf16.msra.mxu0 %v247
    %271 = vmatprep.subr.bf16.mxu0 0
    %272 = vmatpush1.bf16.msra.mxu0 %v248
    %273 = vmatprep.subr.bf16.mxu0 0
    %274 = vmatpush1.bf16.msra.mxu0 0
    %275 = vmatprep.subr.bf16.mxu0 0
    %276 = vmatpush1.bf16.msra.mxu0 0
    %277 = vmatprep.subr.bf16.mxu0 0
    %278 = vmatpush1.bf16.msra.mxu0 0
    %279 = vmatprep.subr.bf16.mxu0 0
    %280 = vmatpush1.bf16.msra.mxu0 0
    %281 = vmatprep.subr.bf16.mxu0 0
    %282 = vmatpush1.bf16.msra.mxu0 0
    %283 = vmatprep.subr.bf16.mxu0 0
    %284 = vmatpush1.bf16.msra.mxu0 0
    %285 = vmatprep.subr.bf16.mxu0 0
    %286 = vmatpush1.bf16.msra.mxu0 0
    %287 = vmatprep.subr.bf16.mxu0 0
    %288 = vmatpush1.bf16.msra.mxu0 0
    %289 = vmatprep.mubr.bf16.mxu0 0
    %290 = vmatmul.mubr.bf16.gmra.mrb[0].mxu0 %v185
    %v291 = vpop.f32.mrb[0].mxu0
    %v292 = vadd.f32 %v207, %v291
    %v293 = vpop.f32.mrb[0].mxu0
    %v294 = vpop.f32.mrb[0].mxu0
    %v295 = vpop.f32.mrb[0].mxu0
    %296 = vdwg.mxu0
    %v297 = vmax.f32 %v292, 0.0
    %v298 = vpack.c.bf16 %v297, %v297
    %v299 = vld [vmem:[#allocation11] sm:$0xf]
    %v300 = vld [vmem:[#allocation11 + $0x4] sm:$0xf]
    %v301 = vld [vmem:[#allocation11 + $0x8] sm:$0xf]
    %v302 = vld [vmem:[#allocation11 + $0xc] sm:$0xf]
    %v303 = vld [vmem:[#allocation11 + $0x10] sm:$0xf]
    %v304 = vld [vmem:[#allocation11 + $0x14] sm:$0xf]
    %v305 = vld [vmem:[#allocation11 + $0x18] sm:$0xf]
    %v306 = vld [vmem:[#allocation11 + $0x1c] sm:$0xf]
    %v307 = vld [vmem:[#allocation11 + $0x20] sm:$0xf]
    %v308 = vld [vmem:[#allocation11 + $0x24] sm:$0xf]
    %v309 = vld [vmem:[#allocation11 + $0x28] sm:$0xf]
    %v310 = vld [vmem:[#allocation11 + $0x2c] sm:$0xf]
    %v311 = vld [vmem:[#allocation11 + $0x30] sm:$0xf]
    %v312 = vld [vmem:[#allocation11 + $0x34] sm:$0xf]
    %v313 = vld [vmem:[#allocation11 + $0x38] sm:$0xf]
    %v314 = vld [vmem:[#allocation11 + $0x3c] sm:$0xf]
    %v315 = vld [vmem:[#allocation13] sm:$0x1]
    %v317 = vlaneseq
    %v318 = vshrl.u32 %v317, 7
    %v319 = vsub.s32 0, %v318
    %v320 = vrot.slane %v315, %v319
    %v338 = vunpack.c.l.b16 %v299
    %v339 = vunpack.c.l.b16 %v300
    %v340 = vunpack.c.l.b16 %v301
    %v341 = vunpack.c.l.b16 %v302
    %v342 = vunpack.c.l.b16 %v303
    %v343 = vunpack.c.l.b16 %v304
    %v344 = vunpack.c.l.b16 %v305
    %v345 = vunpack.c.l.b16 %v306
    %v346 = vunpack.c.l.b16 %v307
    %v347 = vunpack.c.l.b16 %v308
    %v348 = vunpack.c.l.b16 %v309
    %v349 = vunpack.c.l.b16 %v310
    %v350 = vunpack.c.l.b16 %v311
    %v351 = vunpack.c.l.b16 %v312
    %v352 = vunpack.c.l.b16 %v313
    %v353 = vunpack.c.l.b16 %v314
    %v354 = vpack.c.b16 %v339, %v338
    %v355 = vpack.c.b16 %v341, %v340
    %v356 = vpack.c.b16 %v343, %v342
    %v357 = vpack.c.b16 %v345, %v344
    %v358 = vpack.c.b16 %v347, %v346
    %v359 = vpack.c.b16 %v349, %v348
    %v360 = vpack.c.b16 %v351, %v350
    %v361 = vpack.c.b16 %v353, %v352
    %370 = vmatprep.subr.bf16.mxu0 0
    %371 = vmatpush1.bf16.msra.mxu0 %v354
    %372 = vmatprep.subr.bf16.mxu0 0
    %373 = vmatpush1.bf16.msra.mxu0 %v355
    %374 = vmatprep.subr.bf16.mxu0 0
    %375 = vmatpush1.bf16.msra.mxu0 %v356
    %376 = vmatprep.subr.bf16.mxu0 0
    %377 = vmatpush1.bf16.msra.mxu0 %v357
    %378 = vmatprep.subr.bf16.mxu0 0
    %379 = vmatpush1.bf16.msra.mxu0 %v358
    %380 = vmatprep.subr.bf16.mxu0 0
    %381 = vmatpush1.bf16.msra.mxu0 %v359
    %382 = vmatprep.subr.bf16.mxu0 0
    %383 = vmatpush1.bf16.msra.mxu0 %v360
    %384 = vmatprep.subr.bf16.mxu0 0
    %385 = vmatpush1.bf16.msra.mxu0 %v361
    %386 = vmatprep.subr.bf16.mxu0 0
    %387 = vmatpush1.bf16.msra.mxu0 0
    %388 = vmatprep.subr.bf16.mxu0 0
    %389 = vmatpush1.bf16.msra.mxu0 0
    %390 = vmatprep.subr.bf16.mxu0 0
    %391 = vmatpush1.bf16.msra.mxu0 0
    %392 = vmatprep.subr.bf16.mxu0 0
    %393 = vmatpush1.bf16.msra.mxu0 0
    %394 = vmatprep.subr.bf16.mxu0 0
    %395 = vmatpush1.bf16.msra.mxu0 0
    %396 = vmatprep.subr.bf16.mxu0 0
    %397 = vmatpush1.bf16.msra.mxu0 0
    %398 = vmatprep.subr.bf16.mxu0 0
    %399 = vmatpush1.bf16.msra.mxu0 0
    %400 = vmatprep.subr.bf16.mxu0 0
    %401 = vmatpush1.bf16.msra.mxu0 0
    %402 = vmatprep.mubr.bf16.mxu0 0
    %403 = vmatmul.mubr.bf16.gmra.mrb[0].mxu0 %v298
    %v404 = vpop.f32.mrb[0].mxu0
    %v405 = vadd.f32 %v320, %v404
    %v406 = vpop.f32.mrb[0].mxu0
    %v407 = vpop.f32.mrb[0].mxu0
    %v408 = vpop.f32.mrb[0].mxu0
    %409 = vdwg.mxu0
    %410 = vst [vmem:[#allocation14] sm:$0xff] %v405
    // Predicated region
    $region58: #{tpu_custom_call.1} parent=1 // pred_check
      _
    $region59: #{tpu_custom_call.1} parent=1 // pred_check_branch
      %412 = sbr.rel (0) target = $region61
    $region60: #{tpu_custom_call.1} parent=1 // pred_region
      %s414 = ssub.s32 128, 128
      %415 = vsyncadd [#allocation4], %s414
      %s417 = sshll.u32 [#allocation14], 4
      %s418 = int_to_ptr.vmem [resolvable:$true] %s417
      %420 = dma.vmem_to_hbm [thread:$0]  %s418, 128, %s7, [#allocation4]
    $region61: #{tpu_custom_call.1} parent=1 // pred_fallthru
      _
    // Predicated region
    $region62: #{tpu_custom_call.1} parent=1 // pred_check
      _
    $region63: #{tpu_custom_call.1} parent=1 // pred_check_branch
      %422 = sbr.rel (0) target = $region65
    $region64: #{tpu_custom_call.1} parent=1 // pred_region
      %423 = dma.done [#allocation4], 128
    $region65: #{tpu_custom_call.1} parent=1 // pred_fallthru
      _
    %424 = vsyncpa [#allocation3], 1
    %425 = vsyncpa [#allocation6], 1
    %426 = vsyncpa [#allocation9], 1
    %427 = vsyncpa [#allocation12], 1
    %428 = vsyncpa [#allocation4], 1

// kernel: tpu_custom_call.1
$region0: #{tpu_custom_call.1}
  #allocation0 [shape = 'u32[]', space=smem, size = 0x4, offset = 0x4, fixed_abs, tag = 'smem constant byte address 0x4 - core index']
  #allocation1 [shape = 'u32[144,128]{1,0:T(1,128)}', space=vmem, size = 0x12000, scoped, tag = 'internal scratch']
  %s0 = inlined_call_operand.hbm [shape: f32[8,32], index: 0, kind: input, shape index: {}]
  %s1 = inlined_call_operand.hbm [shape: bf16[32,128], index: 1, kind: input, shape index: {}]
  %s2 = inlined_call_operand.hbm [shape: f32[1,128], index: 2, kind: input, shape index: {}]
  %s3 = inlined_call_operand.hbm [shape: bf16[128,128], index: 3, kind: input, shape index: {}]
  %s4 = inlined_call_operand.hbm [shape: f32[1,128], index: 4, kind: input, shape index: {}]
  %s5 = inlined_call_operand.hbm [shape: bf16[128,128], index: 5, kind: input, shape index: {}]
  %s6 = inlined_call_operand.hbm [shape: f32[1,128], index: 6, kind: input, shape index: {}]
  %s7 = inlined_call_operand.hbm [shape: f32[8,128], index: 7, kind: output, shape index: {}]
  %s8 = sld [smem:[#allocation0]]
  $region66: #{tpu_custom_call.1} parent=0
    _
  %s10 = ssub.s32 1, %s8
  %s11 = scalar_select 0, %s10, %s8
  $region1: #{tpu_custom_call.1} parent=0
    #allocation2 [shape = 'u8[4096]{0}', space=vmem, size = 0x1000, scoped, tag = 'input window, operand 0, single buffered']
    #allocation3 [shape = 's32[1]{0}', space=sflag, size = 0x4, scoped, tag = 'scoped memory for tpu_custom_call.1']
    #allocation4 [shape = 's32[1]{0}', space=sflag, size = 0x4, scoped, tag = 'scoped memory for tpu_custom_call.1']
    #allocation5 [shape = 'u8[8192]{0}', space=vmem, size = 0x2000, scoped, tag = 'input window, operand 1, single buffered']
    #allocation6 [shape = 's32[1]{0}', space=sflag, size = 0x4, scoped, tag = 'scoped memory for tpu_custom_call.1']
    #allocation7 [shape = 'u8[512]{0}', space=vmem, size = 0x400, scoped, tag = 'input window, operand 2, single buffered']
    #allocation8 [shape = 'u8[32768]{0}', space=vmem, size = 0x8000, scoped, tag = 'input window, operand 3, single buffered']
    #allocation9 [shape = 's32[1]{0}', space=sflag, size = 0x4, scoped, tag = 'scoped memory for tpu_custom_call.1']
    #allocation10 [shape = 'u8[512]{0}', space=vmem, size = 0x400, scoped, tag = 'input window, operand 4, single buffered']
    #allocation11 [shape = 'u8[32768]{0}', space=vmem, size = 0x8000, scoped, tag = 'input window, operand 5, single buffered']
    #allocation12 [shape = 's32[1]{0}', space=sflag, size = 0x4, scoped, tag = 'scoped memory for tpu_custom_call.1']
    #allocation13 [shape = 'u8[512]{0}', space=vmem, size = 0x400, scoped, tag = 'input window, operand 6, single buffered']
    #allocation14 [shape = 'u8[4096]{0}', space=vmem, size = 0x1000, scoped, tag = 'output window, operand 0, single buffered']
    %12 = vsyncpa [#allocation3], 0
    %13 = vsyncpa [#allocation6], 0
    %14 = vsyncpa [#allocation9], 0
    %15 = vsyncpa [#allocation12], 0
    %16 = vsyncpa [#allocation4], 0
    // Predicated region
    $region2: #{tpu_custom_call.1} parent=1 // pred_check
      _
    $region3: #{tpu_custom_call.1} parent=1 // pred_check_branch
      %18 = sbr.rel (0) target = $region5
    $region4: #{tpu_custom_call.1} parent=1 // pred_region
      %s20 = ssub.s32 128, 128
      %21 = vsyncadd [#allocation3], %s20
      %s23 = sshll.u32 [#allocation2], 4
      %s24 = int_to_ptr.vmem [resolvable:$true] %s23
      %26 = dma.hbm_to_vmem [thread:$0]  %s0, 128, %s24, [#allocation3]
    $region5: #{tpu_custom_call.1} parent=1 // pred_fallthru
      _
    // Predicated region
    $region6: #{tpu_custom_call.1} parent=1 // pred_check
      _
    $region7: #{tpu_custom_call.1} parent=1 // pred_check_branch
      %28 = sbr.rel (0) target = $region9
    $region8: #{tpu_custom_call.1} parent=1 // pred_region
      %s30 = ssub.s32 256, 256
      %31 = vsyncadd [#allocation6], %s30
      %s32 = sshll.u32 [#allocation5], 4
      %s33 = int_to_ptr.vmem [resolvable:$true] %s32
      %38 = dma.hbm_to_vmem [thread:$0]  %s1, 256, %s33, [#allocation6], 64, 64, 4
    $region9: #{tpu_custom_call.1} parent=1 // pred_fallthru
      _
    // Predicated region
    $region10: #{tpu_custom_call.1} parent=1 // pred_check
      _
    $region11: #{tpu_custom_call.1} parent=1 // pred_check_branch
      %40 = sbr.rel (0) target = $region13
    $region12: #{tpu_custom_call.1} parent=1 // pred_region
      %s42 = ssub.s32 16, 16
      %43 = vsyncadd [#allocation6], %s42
      %s45 = sshll.u32 [#allocation7], 4
      %s46 = int_to_ptr.vmem [resolvable:$true] %s45
      %48 = dma.hbm_to_vmem [thread:$0]  %s2, 16, %s46, [#allocation6]
    $region13: #{tpu_custom_call.1} parent=1 // pred_fallthru
      _
    // Predicated region
    $region14: #{tpu_custom_call.1} parent=1 // pred_check
      _
    $region15: #{tpu_custom_call.1} parent=1 // pred_check_branch
      %50 = sbr.rel (0) target = $region17
    $region16: #{tpu_custom_call.1} parent=1 // pred_region
      %s52 = ssub.s32 1024, 1024
      %53 = vsyncadd [#allocation9], %s52
      %s54 = sshll.u32 [#allocation8], 4
      %s55 = int_to_ptr.vmem [resolvable:$true] %s54
      %60 = dma.hbm_to_vmem [thread:$0]  %s3, 1024, %s55, [#allocation9], 64, 64, 4
    $region17: #{tpu_custom_call.1} parent=1 // pred_fallthru
      _
    // Predicated region
    $region18: #{tpu_custom_call.1} parent=1 // pred_check
      _
    $region19: #{tpu_custom_call.1} parent=1 // pred_check_branch
      %62 = sbr.rel (0) target = $region21
    $region20: #{tpu_custom_call.1} parent=1 // pred_region
      %s64 = ssub.s32 16, 16
      %65 = vsyncadd [#allocation9], %s64
      %s67 = sshll.u32 [#allocation10], 4
      %s68 = int_to_ptr.vmem [resolvable:$true] %s67
      %70 = dma.hbm_to_vmem [thread:$0]  %s4, 16, %s68, [#allocation9]
    $region21: #{tpu_custom_call.1} parent=1 // pred_fallthru
      _
    // Predicated region
    $region22: #{tpu_custom_call.1} parent=1 // pred_check
      _
    $region23: #{tpu_custom_call.1} parent=1 // pred_check_branch
      %72 = sbr.rel (0) target = $region25
    $region24: #{tpu_custom_call.1} parent=1 // pred_region
      %s74 = ssub.s32 1024, 1024
      %75 = vsyncadd [#allocation12], %s74
      %s76 = sshll.u32 [#allocation11], 4
      %s77 = int_to_ptr.vmem [resolvable:$true] %s76
      %82 = dma.hbm_to_vmem [thread:$0]  %s5, 1024, %s77, [#allocation12], 64, 64, 4
    $region25: #{tpu_custom_call.1} parent=1 // pred_fallthru
      _
    // Predicated region
    $region26: #{tpu_custom_call.1} parent=1 // pred_check
      _
    $region27: #{tpu_custom_call.1} parent=1 // pred_check_branch
      %84 = sbr.rel (0) target = $region29
    $region28: #{tpu_custom_call.1} parent=1 // pred_region
      %s86 = ssub.s32 16, 16
      %87 = vsyncadd [#allocation12], %s86
      %s89 = sshll.u32 [#allocation13], 4
      %s90 = int_to_ptr.vmem [resolvable:$true] %s89
      %92 = dma.hbm_to_vmem [thread:$0]  %s6, 16, %s90, [#allocation12]
    $region29: #{tpu_custom_call.1} parent=1 // pred_fallthru
      _
    // Predicated region
    $region30: #{tpu_custom_call.1} parent=1 // pred_check
      _
    $region31: #{tpu_custom_call.1} parent=1 // pred_check_branch
      %94 = sbr.rel (0) target = $region33
    $region32: #{tpu_custom_call.1} parent=1 // pred_region
      %95 = dma.done [#allocation3], 128
    $region33: #{tpu_custom_call.1} parent=1 // pred_fallthru
      _
    // Predicated region
    $region34: #{tpu_custom_call.1} parent=1 // pred_check
      _
    $region35: #{tpu_custom_call.1} parent=1 // pred_check_branch
      %97 = sbr.rel (0) target = $region37
    $region36: #{tpu_custom_call.1} parent=1 // pred_region
      %98 = dma.done [#allocation6], 256
    $region37: #{tpu_custom_call.1} parent=1 // pred_fallthru
      _
    // Predicated region
    $region38: #{tpu_custom_call.1} parent=1 // pred_check
      _
    $region39: #{tpu_custom_call.1} parent=1 // pred_check_branch
      %100 = sbr.rel (0) target = $region41
    $region40: #{tpu_custom_call.1} parent=1 // pred_region
      %101 = dma.done [#allocation6], 16
    $region41: #{tpu_custom_call.1} parent=1 // pred_fallthru
      _
    // Predicated region
    $region42: #{tpu_custom_call.1} parent=1 // pred_check
      _
    $region43: #{tpu_custom_call.1} parent=1 // pred_check_branch
      %103 = sbr.rel (0) target = $region45
    $region44: #{tpu_custom_call.1} parent=1 // pred_region
      %104 = dma.done [#allocation9], 1024
    $region45: #{tpu_custom_call.1} parent=1 // pred_fallthru
      _
    // Predicated region
    $region46: #{tpu_custom_call.1} parent=1 // pred_check
      _
    $region47: #{tpu_custom_call.1} parent=1 // pred_check_branch
      %106 = sbr.rel (0) target = $region49
    $region48: #{tpu_custom_call.1} parent=1 // pred_region
      %107 = dma.done [#allocation9], 16
    $region49: #{tpu_custom_call.1} parent=1 // pred_fallthru
      _
    // Predicated region
    $region50: #{tpu_custom_call.1} parent=1 // pred_check
      _
    $region51: #{tpu_custom_call.1} parent=1 // pred_check_branch
      %109 = sbr.rel (0) target = $region53
    $region52: #{tpu_custom_call.1} parent=1 // pred_region
      %110 = dma.done [#allocation12], 1024
    $region53: #{tpu_custom_call.1} parent=1 // pred_fallthru
      _
    // Predicated region
    $region54: #{tpu_custom_call.1} parent=1 // pred_check
      _
    $region55: #{tpu_custom_call.1} parent=1 // pred_check_branch
      %112 = sbr.rel (0) target = $region57
    $region56: #{tpu_custom_call.1} parent=1 // pred_region
      %113 = dma.done [#allocation12], 16
    $region57: #{tpu_custom_call.1} parent=1 // pred_fallthru
      _
    %v115 = vld [vmem:[#allocation2] sm:$0xff]
    %v116 = vpack.c.bf16 %v115, %v115
    %v117 = vld [vmem:[#allocation5] sm:$0xf]
    %v118 = vld [vmem:[#allocation5 + $0x4] sm:$0xf]
    %v119 = vld [vmem:[#allocation5 + $0x8] sm:$0xf]
    %v120 = vld [vmem:[#allocation5 + $0xc] sm:$0xf]
    %v121 = vld [vmem:[#allocation7] sm:$0x1]
    %v123 = vlaneseq
    %v124 = vshrl.u32 %v123, 7
    %v125 = vsub.s32 0, %v124
    %v126 = vrot.slane %v121, %v125
    %v132 = vunpack.c.l.b16 %v117
    %v133 = vunpack.c.l.b16 %v118
    %v134 = vunpack.c.l.b16 %v119
    %v135 = vunpack.c.l.b16 %v120
    %v136 = vpack.c.b16 %v133, %v132
    %v137 = vpack.c.b16 %v135, %v134
    %vm140 = vcmask 261120
    %v142 = vsel %vm140, %v116, 0
    %144 = vmatprep.subr.bf16.mxu0 0
    %145 = vmatpush1.bf16.msra.mxu0 %v136
    %146 = vmatprep.subr.bf16.mxu0 0
    %147 = vmatpush1.bf16.msra.mxu0 %v137
    %148 = vmatprep.subr.bf16.mxu0 0
    %149 = vmatpush1.bf16.msra.mxu0 0
    %150 = vmatprep.subr.bf16.mxu0 0
    %151 = vmatpush1.bf16.msra.mxu0 0
    %152 = vmatprep.subr.bf16.mxu0 0
    %153 = vmatpush1.bf16.msra.mxu0 0
    %154 = vmatprep.subr.bf16.mxu0 0
    %155 = vmatpush1.bf16.msra.mxu0 0
    %156 = vmatprep.subr.bf16.mxu0 0
    %157 = vmatpush1.bf16.msra.mxu0 0
    %158 = vmatprep.subr.bf16.mxu0 0
    %159 = vmatpush1.bf16.msra.mxu0 0
    %160 = vmatprep.subr.bf16.mxu0 0
    %161 = vmatpush1.bf16.msra.mxu0 0
    %162 = vmatprep.subr.bf16.mxu0 0
    %163 = vmatpush1.bf16.msra.mxu0 0
    %164 = vmatprep.subr.bf16.mxu0 0
    %165 = vmatpush1.bf16.msra.mxu0 0
    %166 = vmatprep.subr.bf16.mxu0 0
    %167 = vmatpush1.bf16.msra.mxu0 0
    %168 = vmatprep.subr.bf16.mxu0 0
    %169 = vmatpush1.bf16.msra.mxu0 0
    %170 = vmatprep.subr.bf16.mxu0 0
    %171 = vmatpush1.bf16.msra.mxu0 0
    %172 = vmatprep.subr.bf16.mxu0 0
    %173 = vmatpush1.bf16.msra.mxu0 0
    %174 = vmatprep.subr.bf16.mxu0 0
    %175 = vmatpush1.bf16.msra.mxu0 0
    %176 = vmatprep.mubr.bf16.mxu0 0
    %177 = vmatmul.mubr.bf16.gmra.mrb[0].mxu0 %v142
    %v178 = vpop.f32.mrb[0].mxu0
    %v179 = vadd.f32 %v126, %v178
    %v180 = vpop.f32.mrb[0].mxu0
    %v181 = vpop.f32.mrb[0].mxu0
    %v182 = vpop.f32.mrb[0].mxu0
    %183 = vdwg.mxu0
    %v184 = vmax.f32 %v179, 0.0
    %v185 = vpack.c.bf16 %v184, %v184
    %v186 = vld [vmem:[#allocation8] sm:$0xf]
    %v187 = vld [vmem:[#allocation8 + $0x4] sm:$0xf]
    %v188 = vld [vmem:[#allocation8 + $0x8] sm:$0xf]
    %v189 = vld [vmem:[#allocation8 + $0xc] sm:$0xf]
    %v190 = vld [vmem:[#allocation8 + $0x10] sm:$0xf]
    %v191 = vld [vmem:[#allocation8 + $0x14] sm:$0xf]
    %v192 = vld [vmem:[#allocation8 + $0x18] sm:$0xf]
    %v193 = vld [vmem:[#allocation8 + $0x1c] sm:$0xf]
    %v194 = vld [vmem:[#allocation8 + $0x20] sm:$0xf]
    %v195 = vld [vmem:[#allocation8 + $0x24] sm:$0xf]
    %v196 = vld [vmem:[#allocation8 + $0x28] sm:$0xf]
    %v197 = vld [vmem:[#allocation8 + $0x2c] sm:$0xf]
    %v198 = vld [vmem:[#allocation8 + $0x30] sm:$0xf]
    %v199 = vld [vmem:[#allocation8 + $0x34] sm:$0xf]
    %v200 = vld [vmem:[#allocation8 + $0x38] sm:$0xf]
    %v201 = vld [vmem:[#allocation8 + $0x3c] sm:$0xf]
    %v202 = vld [vmem:[#allocation10] sm:$0x1]
    %v204 = vlaneseq
    %v205 = vshrl.u32 %v204, 7
    %v206 = vsub.s32 0, %v205
    %v207 = vrot.slane %v202, %v206
    %v225 = vunpack.c.l.b16 %v186
    %v226 = vunpack.c.l.b16 %v187
    %v227 = vunpack.c.l.b16 %v188
    %v228 = vunpack.c.l.b16 %v189
    %v229 = vunpack.c.l.b16 %v190
    %v230 = vunpack.c.l.b16 %v191
    %v231 = vunpack.c.l.b16 %v192
    %v232 = vunpack.c.l.b16 %v193
    %v233 = vunpack.c.l.b16 %v194
    %v234 = vunpack.c.l.b16 %v195
    %v235 = vunpack.c.l.b16 %v196
    %v236 = vunpack.c.l.b16 %v197
    %v237 = vunpack.c.l.b16 %v198
    %v238 = vunpack.c.l.b16 %v199
    %v239 = vunpack.c.l.b16 %v200
    %v240 = vunpack.c.l.b16 %v201
    %v241 = vpack.c.b16 %v226, %v225
    %v242 = vpack.c.b16 %v228, %v227
    %v243 = vpack.c.b16 %v230, %v229
    %v244 = vpack.c.b16 %v232, %v231
    %v245 = vpack.c.b16 %v234, %v233
    %v246 = vpack.c.b16 %v236, %v235
    %v247 = vpack.c.b16 %v238, %v237
    %v248 = vpack.c.b16 %v240, %v239
    %257 = vmatprep.subr.bf16.mxu0 0
    %258 = vmatpush1.bf16.msra.mxu0 %v241
    %259 = vmatprep.subr.bf16.mxu0 0
    %260 = vmatpush1.bf16.msra.mxu0 %v242
    %261 = vmatprep.subr.bf16.mxu0 0
    %262 = vmatpush1.bf16.msra.mxu0 %v243
    %263 = vmatprep.subr.bf16.mxu0 0
    %264 = vmatpush1.bf16.msra.mxu0 %v244
    %265 = vmatprep.subr.bf16.mxu0 0
    %266 = vmatpush1.bf16.msra.mxu0 %v245
    %267 = vmatprep.subr.bf16.mxu0 0
    %268 = vmatpush1.bf16.msra.mxu0 %v246
    %269 = vmatprep.subr.bf16.mxu0 0
    %270 = vmatpush1.bf16.msra.mxu0 %v247
    %271 = vmatprep.subr.bf16.mxu0 0
    %272 = vmatpush1.bf16.msra.mxu0 %v248
    %273 = vmatprep.subr.bf16.mxu0 0
    %274 = vmatpush1.bf16.msra.mxu0 0
    %275 = vmatprep.subr.bf16.mxu0 0
    %276 = vmatpush1.bf16.msra.mxu0 0
    %277 = vmatprep.subr.bf16.mxu0 0
    %278 = vmatpush1.bf16.msra.mxu0 0
    %279 = vmatprep.subr.bf16.mxu0 0
    %280 = vmatpush1.bf16.msra.mxu0 0
    %281 = vmatprep.subr.bf16.mxu0 0
    %282 = vmatpush1.bf16.msra.mxu0 0
    %283 = vmatprep.subr.bf16.mxu0 0
    %284 = vmatpush1.bf16.msra.mxu0 0
    %285 = vmatprep.subr.bf16.mxu0 0
    %286 = vmatpush1.bf16.msra.mxu0 0
    %287 = vmatprep.subr.bf16.mxu0 0
    %288 = vmatpush1.bf16.msra.mxu0 0
    %289 = vmatprep.mubr.bf16.mxu0 0
    %290 = vmatmul.mubr.bf16.gmra.mrb[0].mxu0 %v185
    %v291 = vpop.f32.mrb[0].mxu0
    %v292 = vadd.f32 %v207, %v291
    %v293 = vpop.f32.mrb[0].mxu0
    %v294 = vpop.f32.mrb[0].mxu0
    %v295 = vpop.f32.mrb[0].mxu0
    %296 = vdwg.mxu0
    %v297 = vmax.f32 %v292, 0.0
    %v298 = vpack.c.bf16 %v297, %v297
    %v299 = vld [vmem:[#allocation11] sm:$0xf]
    %v300 = vld [vmem:[#allocation11 + $0x4] sm:$0xf]
    %v301 = vld [vmem:[#allocation11 + $0x8] sm:$0xf]
    %v302 = vld [vmem:[#allocation11 + $0xc] sm:$0xf]
    %v303 = vld [vmem:[#allocation11 + $0x10] sm:$0xf]
    %v304 = vld [vmem:[#allocation11 + $0x14] sm:$0xf]
    %v305 = vld [vmem:[#allocation11 + $0x18] sm:$0xf]
    %v306 = vld [vmem:[#allocation11 + $0x1c] sm:$0xf]
    %v307 = vld [vmem:[#allocation11 + $0x20] sm:$0xf]
    %v308 = vld [vmem:[#allocation11 + $0x24] sm:$0xf]
    %v309 = vld [vmem:[#allocation11 + $0x28] sm:$0xf]
    %v310 = vld [vmem:[#allocation11 + $0x2c] sm:$0xf]
    %v311 = vld [vmem:[#allocation11 + $0x30] sm:$0xf]
    %v312 = vld [vmem:[#allocation11 + $0x34] sm:$0xf]
    %v313 = vld [vmem:[#allocation11 + $0x38] sm:$0xf]
    %v314 = vld [vmem:[#allocation11 + $0x3c] sm:$0xf]
    %v315 = vld [vmem:[#allocation13] sm:$0x1]
    %v317 = vlaneseq
    %v318 = vshrl.u32 %v317, 7
    %v319 = vsub.s32 0, %v318
    %v320 = vrot.slane %v315, %v319
    %v338 = vunpack.c.l.b16 %v299
    %v339 = vunpack.c.l.b16 %v300
    %v340 = vunpack.c.l.b16 %v301
    %v341 = vunpack.c.l.b16 %v302
    %v342 = vunpack.c.l.b16 %v303
    %v343 = vunpack.c.l.b16 %v304
    %v344 = vunpack.c.l.b16 %v305
    %v345 = vunpack.c.l.b16 %v306
    %v346 = vunpack.c.l.b16 %v307
    %v347 = vunpack.c.l.b16 %v308
    %v348 = vunpack.c.l.b16 %v309
    %v349 = vunpack.c.l.b16 %v310
    %v350 = vunpack.c.l.b16 %v311
    %v351 = vunpack.c.l.b16 %v312
    %v352 = vunpack.c.l.b16 %v313
    %v353 = vunpack.c.l.b16 %v314
    %v354 = vpack.c.b16 %v339, %v338
    %v355 = vpack.c.b16 %v341, %v340
    %v356 = vpack.c.b16 %v343, %v342
    %v357 = vpack.c.b16 %v345, %v344
    %v358 = vpack.c.b16 %v347, %v346
    %v359 = vpack.c.b16 %v349, %v348
    %v360 = vpack.c.b16 %v351, %v350
    %v361 = vpack.c.b16 %v353, %v352
    %370 = vmatprep.subr.bf16.mxu0 0
    %371 = vmatpush1.bf16.msra.mxu0 %v354
    %372 = vmatprep.subr.bf16.mxu0 0
    %373 = vmatpush1.bf16.msra.mxu0 %v355
    %374 = vmatprep.subr.bf16.mxu0 0
    %375 = vmatpush1.bf16.msra.mxu0 %v356
    %376 = vmatprep.subr.bf16.mxu0 0
    %377 = vmatpush1.bf16.msra.mxu0 %v357
    %378 = vmatprep.subr.bf16.mxu0 0
    %379 = vmatpush1.bf16.msra.mxu0 %v358
    %380 = vmatprep.subr.bf16.mxu0 0
    %381 = vmatpush1.bf16.msra.mxu0 %v359
    %382 = vmatprep.subr.bf16.mxu0 0
    %383 = vmatpush1.bf16.msra.mxu0 %v360
    %384 = vmatprep.subr.bf16.mxu0 0
    %385 = vmatpush1.bf16.msra.mxu0 %v361
    %386 = vmatprep.subr.bf16.mxu0 0
    %387 = vmatpush1.bf16.msra.mxu0 0
    %388 = vmatprep.subr.bf16.mxu0 0
    %389 = vmatpush1.bf16.msra.mxu0 0
    %390 = vmatprep.subr.bf16.mxu0 0
    %391 = vmatpush1.bf16.msra.mxu0 0
    %392 = vmatprep.subr.bf16.mxu0 0
    %393 = vmatpush1.bf16.msra.mxu0 0
    %394 = vmatprep.subr.bf16.mxu0 0
    %395 = vmatpush1.bf16.msra.mxu0 0
    %396 = vmatprep.subr.bf16.mxu0 0
    %397 = vmatpush1.bf16.msra.mxu0 0
    %398 = vmatprep.subr.bf16.mxu0 0
    %399 = vmatpush1.bf16.msra.mxu0 0
    %400 = vmatprep.subr.bf16.mxu0 0
    %401 = vmatpush1.bf16.msra.mxu0 0
    %402 = vmatprep.mubr.bf16.mxu0 0
    %403 = vmatmul.mubr.bf16.gmra.mrb[0].mxu0 %v298
    %v404 = vpop.f32.mrb[0].mxu0
    %v405 = vadd.f32 %v320, %v404
    %v406 = vpop.f32.mrb[0].mxu0
    %v407 = vpop.f32.mrb[0].mxu0
    %v408 = vpop.f32.mrb[0].mxu0
    %409 = vdwg.mxu0
    %410 = vst [vmem:[#allocation14] sm:$0xff] %v405
    // Predicated region
    $region58: #{tpu_custom_call.1} parent=1 // pred_check
      _
    $region59: #{tpu_custom_call.1} parent=1 // pred_check_branch
      %412 = sbr.rel (0) target = $region61
    $region60: #{tpu_custom_call.1} parent=1 // pred_region
      %s414 = ssub.s32 128, 128
      %415 = vsyncadd [#allocation4], %s414
      %s417 = sshll.u32 [#allocation14], 4
      %s418 = int_to_ptr.vmem [resolvable:$true] %s417
      %420 = dma.vmem_to_hbm [thread:$0]  %s418, 128, %s7, [#allocation4]
    $region61: #{tpu_custom_call.1} parent=1 // pred_fallthru
      _
    // Predicated region
    $region62: #{tpu_custom_call.1} parent=1 // pred_check
      _
    $region63: #{tpu_custom_call.1} parent=1 // pred_check_branch
      %422 = sbr.rel (0) target = $region65
    $region64: #{tpu_custom_call.1} parent=1 // pred_region
      %423 = dma.done [#allocation4], 128
    $region65: #{tpu_custom_call.1} parent=1 // pred_fallthru
      _
    %424 = vsyncpa [#allocation3], 1
    %425 = vsyncpa [#allocation6], 1
    %426 = vsyncpa [#allocation9], 1
    %427 = vsyncpa [#allocation12], 1
    %428 = vsyncpa [#allocation4], 1

</llo_original>
